<compile_context>
chip_gen: v6e
topology: v6e:2x2x1
jax: 0.10.0
libtpu: 0.0.40
codegen_flags: <defaults>
</compile_context>

<pallas_src>
import functools

import jax
import jax.numpy as jnp
from jax import lax
from jax.experimental import pallas as pl
from jax.experimental.pallas import tpu as pltpu


def _label_smooth_ce_kernel(
    logits_ref,   # (TN, TC) native logits dtype (bf16 stays bf16)
    target_ref,   # (TN, 1) int32
    out_ref,      # (TN, 1) f32 per-row loss
    m_ref, l_ref, s_ref, xt_ref,   # (TN, 1) f32 scratch
    *,
    smoothing,
    num_classes,
    block_c,
    mask_cols,
    use_mxu,
):
    j = pl.program_id(1)
    last_j = pl.num_programs(1) - 1

    @pl.when(j == 0)
    def _init():
        m_ref[...] = jnp.full_like(m_ref, -jnp.inf)
        l_ref[...] = jnp.zeros_like(l_ref)
        s_ref[...] = jnp.zeros_like(s_ref)
        xt_ref[...] = jnp.zeros_like(xt_ref)

    x = logits_ref[...]                                   # native dtype tile
    tn, tc = x.shape
    col = lax.broadcasted_iota(jnp.int32, (tn, tc), 1)    # tile-local column ids

    if use_mxu:
        ones_nat = jnp.ones((tc, 1), dtype=x.dtype)
        ones_f32 = jnp.ones((tc, 1), dtype=jnp.float32)

        def _row_sum_native(v):   # (TN, TC) native -> (TN, 1) f32, on the MXU
            return jnp.dot(v, ones_nat, precision=lax.Precision.HIGHEST,
                           preferred_element_type=jnp.float32)

        def _row_sum_f32(v):      # (TN, TC) f32 -> (TN, 1) f32, on the MXU
            return jnp.dot(v, ones_f32, precision=lax.Precision.HIGHEST,
                           preferred_element_type=jnp.float32)
    else:
        def _row_sum_native(v):
            return jnp.sum(v.astype(jnp.float32), axis=-1, keepdims=True)

        _row_sum_f32 = _row_sum_native

    def _accumulate(x_exp_in, x_sum_in):
        # x_exp_in feeds max/exp (-inf in padded cols); x_sum_in feeds the plain
        # row sum S (0 in padded cols).  Both stay in the native dtype; f32 only
        # for the exp input and the accumulators.
        m_old = m_ref[...]
        tile_max = jnp.max(x_exp_in, axis=-1, keepdims=True).astype(jnp.float32)
        m_new = jnp.maximum(m_old, tile_max)
        p = jnp.exp(x_exp_in.astype(jnp.float32) - m_new)   # exp(-inf) = 0
        alpha = jnp.exp(m_old - m_new)
        l_ref[...] = alpha * l_ref[...] + _row_sum_f32(p)
        s_ref[...] = s_ref[...] + _row_sum_native(x_sum_in)
        m_ref[...] = m_new

    if mask_cols:
        # Only the last class tile overhangs C; every other tile runs mask-free.
        @pl.when(j != last_j)
        def _full_tile():
            _accumulate(x, x)

        @pl.when(j == last_j)
        def _ragged_tile():
            valid = col < (num_classes - j * block_c)
            x_exp_in = jnp.where(valid, x, jnp.array(-jnp.inf, dtype=x.dtype))
            x_sum_in = jnp.where(valid, x, jnp.array(0, dtype=x.dtype))
            _accumulate(x_exp_in, x_sum_in)
    else:
        _accumulate(x, x)

    # Gather the target logit via a one-hot select + MXU row sum.  Padded columns
    # can never match because target < C, so no extra masking is needed here.
    t_local = target_ref[...] - j * block_c               # (TN, 1) int32
    x_t_sel = jnp.where(col == t_local, x, jnp.array(0, dtype=x.dtype))
    xt_ref[...] = xt_ref[...] + _row_sum_native(x_t_sel)

    # Finalize per-row loss on the last class tile.
    @pl.when(j == last_j)
    def _finalize():
        denom = m_ref[...] + jnp.log(l_ref[...])           # m + log-sum-exp
        sum_log_prob = s_ref[...] - jnp.float32(num_classes) * denom
        log_prob_t = xt_ref[...] - denom
        off_w = jnp.float32(smoothing / (num_classes - 1.0))
        on_w = jnp.float32(1.0 - smoothing)
        out_ref[...] = -(off_w * (sum_log_prob - log_prob_t) + on_w * log_prob_t)


def label_smooth_cross_entropy(logits, target, smoothing=0.0,
                               block_n=256, block_c=None):
    """logits: (N, C) float (any dtype), target: (N,) int -> scalar f32 mean loss."""
    n, c = logits.shape
    if c <= 1:
        raise ValueError("label smoothing needs at least 2 classes (C-1 divide)")

    itemsize = jnp.dtype(logits.dtype).itemsize

    # --- row tile: multiple of 16 sublanes (bf16 packing).  Split small batches so
    #     the "parallel" row axis has >=2 grid steps (both v7x TensorCores busy).
    if n <= 16:
        tn = n
    elif n <= block_n:
        tn = max(16, ((-(-n // 2) + 15) // 16) * 16)
    else:
        tn = max(16, (block_n // 16) * 16)

    # --- class tile: lane dim multiple of 128 (or all of C).  Target ~2 MiB per
    #     logits tile: amortizes per-step overhead, safe for 64 MiB v7x VMEM.
    if block_c is None:
        budget_elems = (2 * 1024 * 1024) // itemsize
        block_c = max(128, (budget_elems // max(tn, 1) // 128) * 128)
    if c <= block_c:
        tc = c
    else:
        tc = max(128, (block_c // 128) * 128)
        if c % tc != 0:
            # Prefer the largest lane-aligned tile (>= tc/2) dividing C exactly,
            # so no tile ever needs column masking.
            for cand in range(tc, max(tc // 2, 128) - 1, -128):
                if c % cand == 0:
                    tc = cand
                    break
    mask_cols = (c % tc) != 0
    # MXU sum-by-ones needs aligned tiles; tiny/unaligned cases keep VALU sums.
    use_mxu = (tc % 128 == 0) and (tn % 8 == 0)

    grid = (pl.cdiv(n, tn), pl.cdiv(c, tc))
    target2d = target.astype(jnp.int32).reshape(n, 1)

    kernel = functools.partial(
        _label_smooth_ce_kernel,
        smoothing=float(smoothing),
        num_classes=c,
        block_c=tc,
        mask_cols=mask_cols,
        use_mxu=use_mxu,
    )

    per_row = pl.pallas_call(
        kernel,
        out_shape=jax.ShapeDtypeStruct((n, 1), jnp.float32),
        grid_spec=pltpu.PrefetchScalarGridSpec(
            num_scalar_prefetch=0,
            grid=grid,
            in_specs=[
                # logits streamed in their native dtype, double-buffered by BlockSpec
                pl.BlockSpec((tn, tc), lambda i, j: (i, j)),
                # targets: row-only index map -> block stays resident across class tiles
                pl.BlockSpec((tn, 1), lambda i, j: (i, 0)),
            ],
            out_specs=pl.BlockSpec((tn, 1), lambda i, j: (i, 0)),
            scratch_shapes=[pltpu.VMEM((tn, 1), jnp.float32)] * 4,
        ),
        compiler_params=pltpu.CompilerParams(
            # row tiles independent -> parallel (sharded across TCs on v7x);
            # class axis is the online-accumulation axis -> arbitrary, last in grid.
            dimension_semantics=("parallel", "arbitrary"),
            vmem_limit_bytes=48 * 1024 * 1024,  # headroom on v7x (64 MiB VMEM)
        ),
    )(logits, target2d)

    # Batch mean outside the kernel keeps row tiles fully independent.
    return jnp.mean(per_row)


def _reference(logits, target, smoothing):
    # pure-JAX mirror of the PyTorch forward, for a sanity check
    log_prob = jax.nn.log_softmax(logits.astype(jnp.float32), axis=-1)
    c = logits.shape[-1]
    weight = jnp.full_like(log_prob, smoothing / (c - 1.0))
    weight = weight.at[jnp.arange(logits.shape[0]), target].set(1.0 - smoothing)
    return jnp.mean(jnp.sum(-weight * log_prob, axis=-1))


if __name__ == "__main__":
    key = jax.random.PRNGKey(0)
    k1, k2, k3, k4, k5, k6 = jax.random.split(key, 6)

    # Case 1: tiny single-tile path (batch=8, classes=32), f32, VALU-sum fallback.
    n1, c1, s1 = 8, 32, 0.1
    logits1 = jax.random.normal(k1, (n1, c1), dtype=jnp.float32)
    target1 = jax.random.randint(k2, (n1,), 0, c1, dtype=jnp.int32)
    loss1 = jax.block_until_ready(
        label_smooth_cross_entropy(logits1, target1, smoothing=s1))
    ref1 = _reference(logits1, target1, s1)
    assert jnp.allclose(loss1, ref1, rtol=1e-5, atol=1e-5), (loss1, ref1)

    # Case 2: gridded online path — ragged last class tile (pl.when-gated mask),
    # partial row tile, bf16 logits, MXU sum-by-ones path.
    n2, c2, s2 = 24, 200, 0.2
    logits2 = jax.random.normal(k3, (n2, c2), dtype=jnp.bfloat16)
    target2 = jax.random.randint(k4, (n2,), 0, c2, dtype=jnp.int32)
    loss2 = jax.block_until_ready(
        label_smooth_cross_entropy(logits2, target2, smoothing=s2,
                                   block_n=16, block_c=128))
    ref2 = _reference(logits2, target2, s2)
    assert jnp.allclose(loss2, ref2, rtol=1e-2, atol=1e-2), (loss2, ref2)

    # Case 3: default tiling, small batch split into 2 row tiles (v7x parallel axis),
    # single class tile, f32.
    n3, c3, s3 = 40, 1000, 0.05
    logits3 = jax.random.normal(k5, (n3, c3), dtype=jnp.float32)
    target3 = jax.random.randint(k6, (n3,), 0, c3, dtype=jnp.int32)
    loss3 = jax.block_until_ready(
        label_smooth_cross_entropy(logits3, target3, smoothing=s3))
    ref3 = _reference(logits3, target3, s3)
    assert jnp.allclose(loss3, ref3, rtol=1e-5, atol=1e-5), (loss3, ref3)

    print("KERNEL_OK")
</pallas_src>

<mosaic_0001>
module attributes {stable_mosaic.version = 11 : i64} {
  func.func @_label_smooth_ce_kernel(%arg0: i32, %arg1: i32, %arg2: memref<8x32xf32, #tpu.memory_space<vmem>>, %arg3: memref<8x1xi32, #tpu.memory_space<vmem>>, %arg4: memref<8x1xf32, #tpu.memory_space<vmem>>, %arg5: memref<8x1xf32, #tpu.memory_space<vmem>>, %arg6: memref<8x1xf32, #tpu.memory_space<vmem>>, %arg7: memref<8x1xf32, #tpu.memory_space<vmem>>, %arg8: memref<8x1xf32, #tpu.memory_space<vmem>>) attributes {dimension_semantics = [#tpu.dimension_semantics<parallel>, #tpu.dimension_semantics<arbitrary>], iteration_bounds = array<i64: 1, 1>, scalar_prefetch = 0 : i64, scratch_operands = 4 : i64, tpu.core_type = #tpu.core_type<tc>, window_params = [{transform_indices = @transform_0, window_bounds = array<i64: 8, 32>}, {transform_indices = @transform_1, window_bounds = array<i64: 8, 1>}, {transform_indices = @transform_2, window_bounds = array<i64: 8, 1>}]} {
    %c0_i32 = arith.constant 0 : i32
    %0 = arith.cmpi eq, %arg1, %c0_i32 : i32
    %1 = arith.extui %0 : i1 to i32
    %c0_i32_0 = arith.constant 0 : i32
    %2 = arith.cmpi ne, %1, %c0_i32_0 : i32
    scf.if %2 {
      %cst_26 = arith.constant 0xFF800000 : f32
      %42 = vector.broadcast %cst_26 : f32 to vector<8x1xf32>
      %c0_27 = arith.constant 0 : index
      %c0_28 = arith.constant 0 : index
      %43 = vector.load %arg5[%c0_27, %c0_28] : memref<8x1xf32, #tpu.memory_space<vmem>>, vector<8x1xf32>
      tpu.vector_store %arg5[%c0_27, %c0_28], %42 {strides = array<i32>} : memref<8x1xf32, #tpu.memory_space<vmem>>, vector<8x1xf32>,
      %cst_29 = arith.constant 0.000000e+00 : f32
      %44 = vector.broadcast %cst_29 : f32 to vector<8x1xf32>
      %c0_30 = arith.constant 0 : index
      %c0_31 = arith.constant 0 : index
      %45 = vector.load %arg6[%c0_30, %c0_31] : memref<8x1xf32, #tpu.memory_space<vmem>>, vector<8x1xf32>
      tpu.vector_store %arg6[%c0_30, %c0_31], %44 {strides = array<i32>} : memref<8x1xf32, #tpu.memory_space<vmem>>, vector<8x1xf32>,
      %cst_32 = arith.constant 0.000000e+00 : f32
      %46 = vector.broadcast %cst_32 : f32 to vector<8x1xf32>
      %c0_33 = arith.constant 0 : index
      %c0_34 = arith.constant 0 : index
      %47 = vector.load %arg7[%c0_33, %c0_34] : memref<8x1xf32, #tpu.memory_space<vmem>>, vector<8x1xf32>
      tpu.vector_store %arg7[%c0_33, %c0_34], %46 {strides = array<i32>} : memref<8x1xf32, #tpu.memory_space<vmem>>, vector<8x1xf32>,
      %cst_35 = arith.constant 0.000000e+00 : f32
      %48 = vector.broadcast %cst_35 : f32 to vector<8x1xf32>
      %c0_36 = arith.constant 0 : index
      %c0_37 = arith.constant 0 : index
      %49 = vector.load %arg8[%c0_36, %c0_37] : memref<8x1xf32, #tpu.memory_space<vmem>>, vector<8x1xf32>
      tpu.vector_store %arg8[%c0_36, %c0_37], %48 {strides = array<i32>} : memref<8x1xf32, #tpu.memory_space<vmem>>, vector<8x1xf32>,
    } else {
    }
    %c0 = arith.constant 0 : index
    %c0_1 = arith.constant 0 : index
    %3 = vector.load %arg2[%c0, %c0_1] : memref<8x32xf32, #tpu.memory_space<vmem>>, vector<8x32xf32>
    %4 = tpu.iota {dimensions = array<i32: 1>} : vector<8x32xi32>
    %c0_2 = arith.constant 0 : index
    %c0_3 = arith.constant 0 : index
    %5 = vector.load %arg5[%c0_2, %c0_3] : memref<8x1xf32, #tpu.memory_space<vmem>>, vector<8x1xf32>
    %cst = arith.constant dense<0xFF800000> : vector<8xf32>
    %6 = vector.multi_reduction <maximumf>, %3, %cst [1] : vector<8x32xf32> to vector<8xf32>
    %7 = vector.shape_cast %6 : vector<8xf32> to vector<8x1xf32>
    %8 = arith.maximumf %5, %7 : vector<8x1xf32>
    %9 = vector.broadcast %8 : vector<8x1xf32> to vector<8x32xf32>
    %10 = arith.subf %3, %9 : vector<8x32xf32>
    %11 = math.exp %10 : vector<8x32xf32>
    %12 = arith.subf %5, %8 : vector<8x1xf32>
    %13 = math.exp %12 : vector<8x1xf32>
    %c0_4 = arith.constant 0 : index
    %c0_5 = arith.constant 0 : index
    %14 = vector.load %arg6[%c0_4, %c0_5] : memref<8x1xf32, #tpu.memory_space<vmem>>, vector<8x1xf32>
    %15 = arith.mulf %13, %14 : vector<8x1xf32>
    %cst_6 = arith.constant dense<0.000000e+00> : vector<8xf32>
    %16 = vector.multi_reduction <add>, %11, %cst_6 [1] : vector<8x32xf32> to vector<8xf32>
    %17 = vector.shape_cast %16 : vector<8xf32> to vector<8x1xf32>
    %18 = arith.addf %15, %17 : vector<8x1xf32>
    %c0_7 = arith.constant 0 : index
    %c0_8 = arith.constant 0 : index
    %19 = vector.load %arg6[%c0_7, %c0_8] : memref<8x1xf32, #tpu.memory_space<vmem>>, vector<8x1xf32>
    tpu.vector_store %arg6[%c0_7, %c0_8], %18 {strides = array<i32>} : memref<8x1xf32, #tpu.memory_space<vmem>>, vector<8x1xf32>,
    %c0_9 = arith.constant 0 : index
    %c0_10 = arith.constant 0 : index
    %20 = vector.load %arg7[%c0_9, %c0_10] : memref<8x1xf32, #tpu.memory_space<vmem>>, vector<8x1xf32>
    %cst_11 = arith.constant dense<0.000000e+00> : vector<8xf32>
    %21 = vector.multi_reduction <add>, %3, %cst_11 [1] : vector<8x32xf32> to vector<8xf32>
    %22 = vector.shape_cast %21 : vector<8xf32> to vector<8x1xf32>
    %23 = arith.addf %20, %22 : vector<8x1xf32>
    %c0_12 = arith.constant 0 : index
    %c0_13 = arith.constant 0 : index
    %24 = vector.load %arg7[%c0_12, %c0_13] : memref<8x1xf32, #tpu.memory_space<vmem>>, vector<8x1xf32>
    tpu.vector_store %arg7[%c0_12, %c0_13], %23 {strides = array<i32>} : memref<8x1xf32, #tpu.memory_space<vmem>>, vector<8x1xf32>,
    %c0_14 = arith.constant 0 : index
    %c0_15 = arith.constant 0 : index
    %25 = vector.load %arg5[%c0_14, %c0_15] : memref<8x1xf32, #tpu.memory_space<vmem>>, vector<8x1xf32>
    tpu.vector_store %arg5[%c0_14, %c0_15], %8 {strides = array<i32>} : memref<8x1xf32, #tpu.memory_space<vmem>>, vector<8x1xf32>,
    %c0_16 = arith.constant 0 : index
    %c0_17 = arith.constant 0 : index
    %26 = vector.load %arg3[%c0_16, %c0_17] : memref<8x1xi32, #tpu.memory_space<vmem>>, vector<8x1xi32>
    %c32_i32 = arith.constant 32 : i32
    %27 = arith.muli %arg1, %c32_i32 : i32
    %28 = vector.broadcast %27 : i32 to vector<8x1xi32>
    %29 = arith.subi %26, %28 : vector<8x1xi32>
    %30 = vector.broadcast %29 : vector<8x1xi32> to vector<8x32xi32>
    %31 = arith.cmpi eq, %4, %30 : vector<8x32xi32>
    %cst_18 = arith.constant 0.000000e+00 : f32
    %32 = vector.broadcast %cst_18 : f32 to vector<8x32xf32>
    %33 = arith.select %31, %3, %32 : vector<8x32xi1>, vector<8x32xf32>
    %c0_19 = arith.constant 0 : index
    %c0_20 = arith.constant 0 : index
    %34 = vector.load %arg8[%c0_19, %c0_20] : memref<8x1xf32, #tpu.memory_space<vmem>>, vector<8x1xf32>
    %cst_21 = arith.constant dense<0.000000e+00> : vector<8xf32>
    %35 = vector.multi_reduction <add>, %33, %cst_21 [1] : vector<8x32xf32> to vector<8xf32>
    %36 = vector.shape_cast %35 : vector<8xf32> to vector<8x1xf32>
    %37 = arith.addf %34, %36 : vector<8x1xf32>
    %c0_22 = arith.constant 0 : index
    %c0_23 = arith.constant 0 : index
    %38 = vector.load %arg8[%c0_22, %c0_23] : memref<8x1xf32, #tpu.memory_space<vmem>>, vector<8x1xf32>
    tpu.vector_store %arg8[%c0_22, %c0_23], %37 {strides = array<i32>} : memref<8x1xf32, #tpu.memory_space<vmem>>, vector<8x1xf32>,
    %c0_i32_24 = arith.constant 0 : i32
    %39 = arith.cmpi eq, %arg1, %c0_i32_24 : i32
    %40 = arith.extui %39 : i1 to i32
    %c0_i32_25 = arith.constant 0 : i32
    %41 = arith.cmpi ne, %40, %c0_i32_25 : i32
    scf.if %41 {
      %c0_26 = arith.constant 0 : index
      %c0_27 = arith.constant 0 : index
      %42 = vector.load %arg5[%c0_26, %c0_27] : memref<8x1xf32, #tpu.memory_space<vmem>>, vector<8x1xf32>
      %c0_28 = arith.constant 0 : index
      %c0_29 = arith.constant 0 : index
      %43 = vector.load %arg6[%c0_28, %c0_29] : memref<8x1xf32, #tpu.memory_space<vmem>>, vector<8x1xf32>
      %44 = math.log %43 : vector<8x1xf32>
      %45 = arith.addf %42, %44 : vector<8x1xf32>
      %c0_30 = arith.constant 0 : index
      %c0_31 = arith.constant 0 : index
      %46 = vector.load %arg7[%c0_30, %c0_31] : memref<8x1xf32, #tpu.memory_space<vmem>>, vector<8x1xf32>
      %cst_32 = arith.constant 3.200000e+01 : f32
      %47 = vector.broadcast %cst_32 : f32 to vector<8x1xf32>
      %48 = arith.mulf %47, %45 : vector<8x1xf32>
      %49 = arith.subf %46, %48 : vector<8x1xf32>
      %c0_33 = arith.constant 0 : index
      %c0_34 = arith.constant 0 : index
      %50 = vector.load %arg8[%c0_33, %c0_34] : memref<8x1xf32, #tpu.memory_space<vmem>>, vector<8x1xf32>
      %51 = arith.subf %50, %45 : vector<8x1xf32>
      %52 = arith.subf %49, %51 : vector<8x1xf32>
      %cst_35 = arith.constant 0.0032258064 : f32
      %53 = vector.broadcast %cst_35 : f32 to vector<8x1xf32>
      %54 = arith.mulf %53, %52 : vector<8x1xf32>
      %cst_36 = arith.constant 0.899999976 : f32
      %55 = vector.broadcast %cst_36 : f32 to vector<8x1xf32>
      %56 = arith.mulf %55, %51 : vector<8x1xf32>
      %57 = arith.addf %54, %56 : vector<8x1xf32>
      %cst_37 = arith.constant 0.000000e+00 : f32
      %58 = vector.broadcast %cst_37 : f32 to vector<8x1xf32>
      %59 = arith.subf %58, %57 : vector<8x1xf32>
      %c0_38 = arith.constant 0 : index
      %c0_39 = arith.constant 0 : index
      %60 = vector.load %arg4[%c0_38, %c0_39] : memref<8x1xf32, #tpu.memory_space<vmem>>, vector<8x1xf32>
      tpu.vector_store %arg4[%c0_38, %c0_39], %59 {strides = array<i32>} : memref<8x1xf32, #tpu.memory_space<vmem>>, vector<8x1xf32>,
    } else {
    }
    return
  }
  func.func @transform_0(%arg0: i32, %arg1: i32) -> (i32, i32) {
    %c0_i32 = arith.constant 0 : i32
    return %arg0, %arg1 : i32, i32
  }
  func.func @transform_1(%arg0: i32, %arg1: i32) -> (i32, i32) {
    %c0_i32 = arith.constant 0 : i32
    %c0_i32_0 = arith.constant 0 : i32
    return %arg0, %c0_i32 : i32, i32
  }
  func.func @transform_2(%arg0: i32, %arg1: i32) -> (i32, i32) {
    %c0_i32 = arith.constant 0 : i32
    %c0_i32_0 = arith.constant 0 : i32
    return %arg0, %c0_i32 : i32, i32
  }
}

</mosaic_0001>

<llo_original>
// kernel: tpu_custom_call.1
$region0: #{tpu_custom_call.1}
  #allocation0 [shape = 'u32[]', space=smem, size = 0x4, offset = 0x4, fixed_abs, tag = 'smem constant byte address 0x4 - core index']
  #allocation1 [shape = 'u32[144,128]{1,0:T(1,128)}', space=vmem, size = 0x12000, scoped, tag = 'internal scratch']
  #allocation2 [shape = 'f32[8,1]{1,0:T(8,128)}', space=vmem, size = 0x1000, scoped, tag = 'scratch operand']
  #allocation3 [shape = 'f32[8,1]{1,0:T(8,128)}', space=vmem, size = 0x1000, scoped, tag = 'scratch operand']
  #allocation4 [shape = 'f32[8,1]{1,0:T(8,128)}', space=vmem, size = 0x1000, scoped, tag = 'scratch operand']
  #allocation5 [shape = 'f32[8,1]{1,0:T(8,128)}', space=vmem, size = 0x1000, scoped, tag = 'scratch operand']
  %s0 = inlined_call_operand.vmem [shape: f32[8,32], index: 0, kind: input, shape index: {}]
  %s1 = inlined_call_operand.vmem [shape: s32[8,1], index: 1, kind: input, shape index: {}]
  %s2 = inlined_call_operand.vmem [shape: f32[8,1], index: 2, kind: output, shape index: {}]
  %s3 = sld [smem:[#allocation0]]
  $region26: #{tpu_custom_call.1} parent=0
    _
  %s5 = ssub.s32 1, %s3
  %s6 = scalar_select 0, %s5, %s3
  // Predicated region
  $region2: #{tpu_custom_call.1} parent=0 // pred_check
    _
  $region3: #{tpu_custom_call.1} parent=0 // pred_check_branch
    %8 = sbr.rel (0) target = $region5
  $region4: #{tpu_custom_call.1} parent=0 // pred_region
    _
  $region5: #{tpu_custom_call.1} parent=0 // pred_fallthru
    _
  // Predicated region
  $region6: #{tpu_custom_call.1} parent=0 // pred_check
    _
  $region7: #{tpu_custom_call.1} parent=0 // pred_check_branch
    %10 = sbr.rel (0) target = $region9
  $region8: #{tpu_custom_call.1} parent=0 // pred_region
    _
  $region9: #{tpu_custom_call.1} parent=0 // pred_fallthru
    _
  %p11 = scmp.eq.s32.totalorder 0, 0
  // Predicated region
  $region10: #{tpu_custom_call.1} parent=0 // pred_check
    %p12 = pneg %p11
  $region11: #{tpu_custom_call.1} parent=0 // pred_check_branch
    %14 = sbr.rel (%p12) target = $region13
  $region12: #{tpu_custom_call.1} parent=0 // pred_region
    %vm15 = vcmask 7168
    %16 = vst.msk [vmem:[#allocation2] sm:$0xff] %vm15, -inf
    %17 = vst.msk [vmem:[#allocation3] sm:$0xff] %vm15, 0.0
    %18 = vst.msk [vmem:[#allocation4] sm:$0xff] %vm15, 0.0
    %19 = vst.msk [vmem:[#allocation5] sm:$0xff] %vm15, 0.0
  $region13: #{tpu_custom_call.1} parent=0 // pred_fallthru
    _
  %v20 = vld [vmem:[%s0] sm:$0xff]
  %v21 = vlaneseq
  %v22 = vand.u32 %v21, 127
  %v23 = vld [vmem:[#allocation2] sm:$0xff]
  %vm24 = vcmask 261120
  %v25 = vsel %vm24, %v20, -inf
  %26 = vmax.xlane.f32.xlu0 %v25
  %v27 = vpop.xlane.xlu0 %26
  %v28 = vmax.f32 %v23, %v27
  %30 = vset.pattern.permute.xlu0 0
  %31 = vperm.xlu0 %30, %v28
  %v32 = vpop.permute.xlu0 %31
  %v34 = vsub.f32 %v20, %v32
  %v35 = vmul.f32 %v34, 1.442695
  %v36 = vpow.pop %v35
  %v37 = vsub.f32 %v23, %v28
  %v38 = vmul.f32 %v37, 1.442695
  %v39 = vpow.pop %v38
  %v40 = vld [vmem:[#allocation3] sm:$0xff]
  %v41 = vmul.f32 %v39, %v40
  %v42 = vsel %vm24, %v36, 0.0
  %43 = vadd.xlane.f32.xlu0 %v42
  %v44 = vpop.xlane.xlu0 %43
  %v45 = vadd.f32 %v41, %v44
  %vm46 = vcmask 7168
  %47 = vst.msk [vmem:[#allocation3] sm:$0xff] %vm46, %v45
  %v48 = vld [vmem:[#allocation4] sm:$0xff]
  %v49 = vsel %vm24, %v20, 0.0
  %50 = vadd.xlane.f32.xlu0 %v49
  %v51 = vpop.xlane.xlu0 %50
  %v52 = vadd.f32 %v48, %v51
  %53 = vst.msk [vmem:[#allocation4] sm:$0xff] %vm46, %v52
  %54 = vst.msk [vmem:[#allocation2] sm:$0xff] %vm46, %v28
  %v55 = vld [vmem:[%s1] sm:$0xff]
  %s56 = smul.u32 0, 32
  %v57 = vstv %s56
  %v58 = vsub.s32 %v55, %v57
  %59 = vset.pattern.permute.xlu0 0
  %60 = vperm.xlu0 %59, %v58
  %v61 = vpop.permute.xlu0 %60
  %vm62 = vcmp.eq.s32.totalorder %v22, %v61
  %v63 = vsel %vm62, %v20, 0.0
  %v64 = vld [vmem:[#allocation5] sm:$0xff]
  %v65 = vsel %vm24, %v63, 0.0
  %66 = vadd.xlane.f32.xlu0 %v65
  %v67 = vpop.xlane.xlu0 %66
  %v68 = vadd.f32 %v64, %v67
  %69 = vst.msk [vmem:[#allocation5] sm:$0xff] %vm46, %v68
  // Predicated region
  $region14: #{tpu_custom_call.1} parent=0 // pred_check
    %p70 = pneg %p11
  $region15: #{tpu_custom_call.1} parent=0 // pred_check_branch
    %72 = sbr.rel (%p70) target = $region17
  $region16: #{tpu_custom_call.1} parent=0 // pred_region
    %v73 = vld [vmem:[#allocation2] sm:$0xff]
    %v74 = vld [vmem:[#allocation3] sm:$0xff]
    %v75 = vlog2.pop %v74
    %v76 = vmul.f32 %v75, 0.6931472
    %v77 = vadd.f32 %v73, %v76
    %v78 = vld [vmem:[#allocation4] sm:$0xff]
    %v79 = vmul.f32 %v77, 32.0
    %v80 = vsub.f32 %v78, %v79
    %v81 = vld [vmem:[#allocation5] sm:$0xff]
    %v82 = vsub.f32 %v81, %v77
    %v83 = vsub.f32 %v80, %v82
    %v84 = vmul.f32 %v83, 0.0032258064
    %v85 = vmul.f32 %v82, 0.9
    %v86 = vadd.f32 %v84, %v85
    %v87 = vsub.f32 0.0, %v86
    %88 = vst.msk [vmem:[%s2] sm:$0xff] %vm46, %v87
  $region17: #{tpu_custom_call.1} parent=0 // pred_fallthru
    _
  // Predicated region
  $region18: #{tpu_custom_call.1} parent=0 // pred_check
    _
  $region19: #{tpu_custom_call.1} parent=0 // pred_check_branch
    %90 = sbr.rel (0) target = $region21
  $region20: #{tpu_custom_call.1} parent=0 // pred_region
    _
  $region21: #{tpu_custom_call.1} parent=0 // pred_fallthru
    _
  // Predicated region
  $region22: #{tpu_custom_call.1} parent=0 // pred_check
    _
  $region23: #{tpu_custom_call.1} parent=0 // pred_check_branch
    %92 = sbr.rel (0) target = $region25
  $region24: #{tpu_custom_call.1} parent=0 // pred_region
    _
  $region25: #{tpu_custom_call.1} parent=0 // pred_fallthru
    _

</llo_original>
